<compile_context>
chip_gen: v5e
topology: v5e:2x2
jax: 0.10.0
libtpu: 0.0.40
codegen_flags: <defaults>
</compile_context>

<pallas_src>
import math

import jax
import jax.numpy as jnp
from jax.experimental import pallas as pl
from jax.experimental.pallas import tpu as pltpu


def _round_up(x, m):
    return (x + m - 1) // m * m


def _sublane_padded(n, dtype):
    """Second-to-last dim size as laid out in VMEM (sublane packed & padded)."""
    pack = max(1, 4 // jnp.dtype(dtype).itemsize)
    return _round_up(max(int(n), 1), 8 * pack)


def _make_ce_kernel(tile, nk, n_blocks_total, s_true):
    needs_mask = (n_blocks_total * tile != s_true)

    def kernel(w_ref, logs_ref, y_ref, out_ref, acc_ref):
        i = pl.program_id(0)
        k = pl.program_id(1)

        @pl.when(k == 0)
        def _():
            acc_ref[...] = jnp.zeros_like(acc_ref)

        logs = logs_ref[...].astype(jnp.float32)    # (N, C, T)
        y = y_ref[...].astype(jnp.float32)          # (N, C, T) strictly one-hot
        w = w_ref[...]                              # (1, C, 1) class weights

        # log-softmax pieces over the channel (sublane) axis
        m = jnp.max(logs, axis=1, keepdims=True)                # (N,1,T)
        z = logs - m
        lse = jnp.log(jnp.sum(jnp.exp(z), axis=1))              # (N,T)

        # yb_oh assumed strictly one-hot => it IS the argmax one-hot.
        # (Deviates from torch.argmax tie-breaking only for non-one-hot input.)
        yw = y * w                                               # weighted one-hot
        w_t = jnp.sum(yw, axis=1)                                # weight[tgt]   (N,T)
        wz_t = jnp.sum(yw * z, axis=1)                           # weight[tgt]*z[tgt]
        loss = w_t * lse - wz_t                                  # (N,T)

        g = i * nk + k                                           # global block index
        if needs_mask:
            is_tail = g == (n_blocks_total - 1)

            @pl.when(is_tail)
            def _():
                lane = jax.lax.broadcasted_iota(jnp.int32, loss.shape, 1)
                valid = (g * tile + lane) < s_true
                acc_ref[...] += jnp.where(valid, loss, 0.0)

            @pl.when(jnp.logical_not(is_tail))
            def _():
                acc_ref[...] += loss
        else:
            acc_ref[...] += loss

        @pl.when(k == pl.num_programs(1) - 1)
        def _():
            out_ref[...] = jnp.sum(acc_ref[...], axis=(0, 1), keepdims=True)

    return kernel


def cross_entropy_exp_weight_loss(logs, yb_oh, w_list, mask=None,
                                  spatial_tile=8192):
    """JAX/Pallas equivalent of ovseg cross_entropy_exp_weight.forward (mask=None)."""
    assert logs.shape == yb_oh.shape
    # TODO(synk): optional `mask` argument (default None in the module) is not
    # wired through; it would be one extra (N,T) multiply + one more input.
    assert mask is None, "mask is not supported"

    nb, nch = logs.shape[:2]
    assert len(w_list) + 1 == nch, "len(w_list) must be n_channels - 1"

    S = 1
    for d in logs.shape[2:]:
        S *= int(d)
    logs3 = logs.reshape(nb, nch, S)
    y3 = yb_oh.reshape(nb, nch, S)

    # class weights [1, exp(-w_1), ...] as a tiny VMEM input (Pallas forbids
    # captured array constants inside the kernel body).
    w3 = jnp.asarray([1.0] + [math.exp(-float(w)) for w in w_list],
                     jnp.float32).reshape(1, nch, 1)

    # ---- tiling: big lane tiles, VMEM-budgeted incl. sublane padding -------
    in_bytes_per_lane = sum(
        nb * _sublane_padded(nch, a.dtype) * a.dtype.itemsize for a in (logs3, y3))
    acc_bytes_per_lane = _round_up(nb, 8) * 4
    tmp_bytes_per_lane = 4 * nb * _sublane_padded(nch, jnp.float32) * 4  # f32 temps headroom
    per_lane_bytes = 2 * in_bytes_per_lane + acc_bytes_per_lane + tmp_bytes_per_lane

    budget = 40 * 1024 * 1024          # leaves headroom inside v7x's 64 MiB VMEM
    tile_cap = max(128, (budget // per_lane_bytes) // 128 * 128)
    tile = int(min(spatial_tile, tile_cap, _round_up(S, 128)))
    tile = _round_up(tile, 128)

    # No host-side padding: ragged last block reads OOB and is masked in-kernel.
    nk_total = int(pl.cdiv(S, tile))
    # TODO(synk): on v7x (2 TCs/chip) verify "parallel" shards the leading axis
    # across TensorCores; otherwise switch it to pltpu.CORE_PARALLEL.
    n_splits = 2 if (nk_total >= 2 and nk_total % 2 == 0) else 1
    nk = nk_total // n_splits

    w_spec = pl.BlockSpec((1, nch, 1), lambda i, k: (0, 0, 0))
    in_spec = pl.BlockSpec((nb, nch, tile), lambda i, k: (0, 0, i * nk + k))
    out_spec = pl.BlockSpec((1, 1), lambda i, k: (i, 0))

    kernel = _make_ce_kernel(tile, nk, nk_total, S)

    cost = pl.CostEstimate(
        flops=8 * nb * nch * S,
        transcendentals=nb * (nch + 1) * S,
        bytes_accessed=int(logs3.size * logs3.dtype.itemsize
                           + y3.size * y3.dtype.itemsize),
    )

    partial = pl.pallas_call(
        kernel,
        out_shape=jax.ShapeDtypeStruct((n_splits, 1), jnp.float32),
        grid_spec=pltpu.PrefetchScalarGridSpec(
            num_scalar_prefetch=0,
            grid=(n_splits, nk),
            in_specs=[w_spec, in_spec, in_spec],
            out_specs=out_spec,
            scratch_shapes=[pltpu.VMEM((nb, tile), jnp.float32)],
        ),
        compiler_params=pltpu.CompilerParams(
            dimension_semantics=("parallel", "arbitrary"),
            vmem_limit_bytes=48 * 1024 * 1024,
        ),
        cost_estimate=cost,
    )(w3, logs3, y3)

    return jnp.sum(partial) / (nb * S)


if __name__ == "__main__":
    key = jax.random.PRNGKey(0)
    k1, k2 = jax.random.split(key)

    nb, nch, H, W = 2, 4, 16, 16
    w_list = [0.5, 1.0, 2.0]                      # len == nch - 1

    logs = jax.random.normal(k1, (nb, nch, H, W), dtype=jnp.float32)
    labels = jax.random.randint(k2, (nb, H, W), 0, nch)
    yb_oh = jax.nn.one_hot(labels, nch, axis=1, dtype=jnp.float32)

    loss = cross_entropy_exp_weight_loss(logs, yb_oh, w_list)
    loss = jax.block_until_ready(loss)

    # plain-JAX reference of the same forward math (sanity check)
    wvec = jnp.asarray([1.0] + [math.exp(-w) for w in w_list], jnp.float32)
    logp = jax.nn.log_softmax(logs, axis=1)
    tgt = jnp.argmax(yb_oh, axis=1)                                # (nb, H, W)
    gathered = jnp.take_along_axis(logp, tgt[:, None], axis=1)[:, 0]
    ref = jnp.mean(-wvec[tgt] * gathered)

    assert abs(float(loss) - float(ref)) < 1e-4, (float(loss), float(ref))
    print("KERNEL_OK")
</pallas_src>

<mosaic_0001>
module attributes {stable_mosaic.version = 11 : i64} {
  func.func @kernel(%arg0: i32, %arg1: i32, %arg2: memref<1x4x1xf32, #tpu.memory_space<vmem>>, %arg3: memref<2x4x256xf32, #tpu.memory_space<vmem>>, %arg4: memref<2x4x256xf32, #tpu.memory_space<vmem>>, %arg5: memref<1x1xf32, #tpu.memory_space<vmem>>, %arg6: memref<2x256xf32, #tpu.memory_space<vmem>>) attributes {dimension_semantics = [#tpu.dimension_semantics<parallel>, #tpu.dimension_semantics<arbitrary>], iteration_bounds = array<i64: 1, 1>, scalar_prefetch = 0 : i64, scratch_operands = 1 : i64, tpu.core_type = #tpu.core_type<tc>, window_params = [{pipeline_mode = #tpu.pipeline_mode<synchronous>, transform_indices = @transform_0, window_bounds = array<i64: 1, 4, 1>}, {transform_indices = @transform_1, window_bounds = array<i64: 2, 4, 256>}, {transform_indices = @transform_2, window_bounds = array<i64: 2, 4, 256>}, {transform_indices = @transform_3, window_bounds = array<i64: 1, 1>}]} {
    %c0_i32 = arith.constant 0 : i32
    %0 = arith.cmpi eq, %arg1, %c0_i32 : i32
    %1 = arith.extui %0 : i1 to i32
    %c0_i32_0 = arith.constant 0 : i32
    %2 = arith.cmpi ne, %1, %c0_i32_0 : i32
    scf.if %2 {
      %cst_18 = arith.constant 0.000000e+00 : f32
      %26 = vector.broadcast %cst_18 : f32 to vector<2x256xf32>
      %c0_19 = arith.constant 0 : index
      %c0_20 = arith.constant 0 : index
      %27 = vector.load %arg6[%c0_19, %c0_20] : memref<2x256xf32, #tpu.memory_space<vmem>>, vector<2x256xf32>
      tpu.vector_store %arg6[%c0_19, %c0_20], %26 {strides = array<i32>} : memref<2x256xf32, #tpu.memory_space<vmem>>, vector<2x256xf32>,
    } else {
    }
    %c0 = arith.constant 0 : index
    %c0_1 = arith.constant 0 : index
    %c0_2 = arith.constant 0 : index
    %3 = vector.load %arg3[%c0, %c0_1, %c0_2] : memref<2x4x256xf32, #tpu.memory_space<vmem>>, vector<2x4x256xf32>
    %c0_3 = arith.constant 0 : index
    %c0_4 = arith.constant 0 : index
    %c0_5 = arith.constant 0 : index
    %4 = vector.load %arg4[%c0_3, %c0_4, %c0_5] : memref<2x4x256xf32, #tpu.memory_space<vmem>>, vector<2x4x256xf32>
    %c0_6 = arith.constant 0 : index
    %c0_7 = arith.constant 0 : index
    %c0_8 = arith.constant 0 : index
    %5 = vector.load %arg2[%c0_6, %c0_7, %c0_8] : memref<1x4x1xf32, #tpu.memory_space<vmem>>, vector<1x4x1xf32>
    %cst = arith.constant dense<0xFF800000> : vector<2x256xf32>
    %6 = vector.multi_reduction <maximumf>, %3, %cst [1] : vector<2x4x256xf32> to vector<2x256xf32>
    %7 = vector.shape_cast %6 : vector<2x256xf32> to vector<2x1x256xf32>
    %8 = vector.broadcast %7 : vector<2x1x256xf32> to vector<2x4x256xf32>
    %9 = arith.subf %3, %8 : vector<2x4x256xf32>
    %10 = math.exp %9 : vector<2x4x256xf32>
    %cst_9 = arith.constant dense<0.000000e+00> : vector<2x256xf32>
    %11 = vector.multi_reduction <add>, %10, %cst_9 [1] : vector<2x4x256xf32> to vector<2x256xf32>
    %12 = math.log %11 : vector<2x256xf32>
    %13 = vector.broadcast %5 : vector<1x4x1xf32> to vector<2x4x256xf32>
    %14 = arith.mulf %4, %13 : vector<2x4x256xf32>
    %cst_10 = arith.constant dense<0.000000e+00> : vector<2x256xf32>
    %15 = vector.multi_reduction <add>, %14, %cst_10 [1] : vector<2x4x256xf32> to vector<2x256xf32>
    %16 = arith.mulf %14, %9 : vector<2x4x256xf32>
    %cst_11 = arith.constant dense<0.000000e+00> : vector<2x256xf32>
    %17 = vector.multi_reduction <add>, %16, %cst_11 [1] : vector<2x4x256xf32> to vector<2x256xf32>
    %18 = arith.mulf %15, %12 : vector<2x256xf32>
    %19 = arith.subf %18, %17 : vector<2x256xf32>
    %c0_12 = arith.constant 0 : index
    %c0_13 = arith.constant 0 : index
    %20 = vector.load %arg6[%c0_12, %c0_13] : memref<2x256xf32, #tpu.memory_space<vmem>>, vector<2x256xf32>
    %21 = arith.addf %20, %19 : vector<2x256xf32>
    %c0_14 = arith.constant 0 : index
    %c0_15 = arith.constant 0 : index
    %22 = vector.load %arg6[%c0_14, %c0_15] : memref<2x256xf32, #tpu.memory_space<vmem>>, vector<2x256xf32>
    tpu.vector_store %arg6[%c0_14, %c0_15], %21 {strides = array<i32>} : memref<2x256xf32, #tpu.memory_space<vmem>>, vector<2x256xf32>,
    %c0_i32_16 = arith.constant 0 : i32
    %23 = arith.cmpi eq, %arg1, %c0_i32_16 : i32
    %24 = arith.extui %23 : i1 to i32
    %c0_i32_17 = arith.constant 0 : i32
    %25 = arith.cmpi ne, %24, %c0_i32_17 : i32
    scf.if %25 {
      %c0_18 = arith.constant 0 : index
      %c0_19 = arith.constant 0 : index
      %26 = vector.load %arg6[%c0_18, %c0_19] : memref<2x256xf32, #tpu.memory_space<vmem>>, vector<2x256xf32>
      %27 = vector.shape_cast %26 : vector<2x256xf32> to vector<1x2x256xf32>
      %cst_20 = arith.constant dense<0.000000e+00> : vector<1xf32>
      %28 = vector.multi_reduction <add>, %27, %cst_20 [1, 2] : vector<1x2x256xf32> to vector<1xf32>
      %29 = vector.shape_cast %28 : vector<1xf32> to vector<1x1x1xf32>
      %30 = vector.extract %29[0, 0, 0] : f32 from vector<1x1x1xf32>
      %31 = vector.broadcast %30 : f32 to vector<1x1xf32>
      %c0_21 = arith.constant 0 : index
      %c0_22 = arith.constant 0 : index
      %32 = vector.load %arg5[%c0_21, %c0_22] : memref<1x1xf32, #tpu.memory_space<vmem>>, vector<1x1xf32>
      tpu.vector_store %arg5[%c0_21, %c0_22], %31 {strides = array<i32>} : memref<1x1xf32, #tpu.memory_space<vmem>>, vector<1x1xf32>,
    } else {
    }
    return
  }
  func.func @transform_0(%arg0: i32, %arg1: i32) -> (i32, i32, i32) {
    %c0_i32 = arith.constant 0 : i32
    %c0_i32_0 = arith.constant 0 : i32
    %c0_i32_1 = arith.constant 0 : i32
    %c0_i32_2 = arith.constant 0 : i32
    return %c0_i32, %c0_i32_0, %c0_i32_1 : i32, i32, i32
  }
  func.func @transform_1(%arg0: i32, %arg1: i32) -> (i32, i32, i32) {
    %c1_i32 = arith.constant 1 : i32
    %0 = arith.muli %arg0, %c1_i32 : i32
    %1 = arith.addi %0, %arg1 : i32
    %c0_i32 = arith.constant 0 : i32
    %c0_i32_0 = arith.constant 0 : i32
    %c0_i32_1 = arith.constant 0 : i32
    return %c0_i32, %c0_i32_0, %1 : i32, i32, i32
  }
  func.func @transform_2(%arg0: i32, %arg1: i32) -> (i32, i32, i32) {
    %c1_i32 = arith.constant 1 : i32
    %0 = arith.muli %arg0, %c1_i32 : i32
    %1 = arith.addi %0, %arg1 : i32
    %c0_i32 = arith.constant 0 : i32
    %c0_i32_0 = arith.constant 0 : i32
    %c0_i32_1 = arith.constant 0 : i32
    return %c0_i32, %c0_i32_0, %1 : i32, i32, i32
  }
  func.func @transform_3(%arg0: i32, %arg1: i32) -> (i32, i32) {
    %c0_i32 = arith.constant 0 : i32
    %c0_i32_0 = arith.constant 0 : i32
    return %arg0, %c0_i32 : i32, i32
  }
}

</mosaic_0001>

<llo_original>
// kernel: tpu_custom_call.1
$region0: #{tpu_custom_call.1}
  #allocation0 [shape = 'u32[]', space=smem, size = 0x4, offset = 0x4, fixed_abs, tag = 'smem constant byte address 0x4 - core index']
  #allocation1 [shape = 'u32[72,128]{1,0:T(1,128)}', space=vmem, size = 0x9000, scoped, tag = 'internal scratch']
  #allocation2 [shape = 'f32[2,256]{1,0:T(2,128)}', space=vmem, size = 0x800, scoped, tag = 'scratch operand']
  %s0 = inlined_call_operand.vmem [shape: f32[1,4,1], index: 0, kind: input, shape index: {}]
  %s1 = inlined_call_operand.hbm [shape: f32[2,4,256], index: 1, kind: input, shape index: {}]
  %s2 = inlined_call_operand.hbm [shape: f32[2,4,256], index: 2, kind: input, shape index: {}]
  %s3 = inlined_call_operand.hbm [shape: f32[1,1], index: 3, kind: output, shape index: {}]
  %s4 = sld [smem:[#allocation0]]
  $region38: #{tpu_custom_call.1} parent=0
    _
  %s6 = ssub.s32 1, %s4
  %s7 = scalar_select 0, %s6, %s4
  $region1: #{tpu_custom_call.1} parent=0
    #allocation3 [shape = 'u8[8192]{0}', space=vmem, size = 0x2000, scoped, tag = 'input window, operand 1, single buffered']
    #allocation4 [shape = 's32[1]{0}', space=sflag, size = 0x4, scoped, tag = 'scoped memory for tpu_custom_call.1']
    #allocation5 [shape = 's32[1]{0}', space=sflag, size = 0x4, scoped, tag = 'scoped memory for tpu_custom_call.1']
    #allocation6 [shape = 'u8[8192]{0}', space=vmem, size = 0x2000, scoped, tag = 'input window, operand 2, single buffered']
    #allocation7 [shape = 's32[1]{0}', space=sflag, size = 0x4, scoped, tag = 'scoped memory for tpu_custom_call.1']
    #allocation8 [shape = 'u8[512]{0}', space=vmem, size = 0x400, scoped, tag = 'output window, operand 0, single buffered']
    %8 = vsyncpa [#allocation4], 0
    %9 = vsyncpa [#allocation7], 0
    %10 = vsyncpa [#allocation5], 0
    // Predicated region
    $region2: #{tpu_custom_call.1} parent=1 // pred_check
      _
    $region3: #{tpu_custom_call.1} parent=1 // pred_check_branch
      %12 = sbr.rel (0) target = $region5
    $region4: #{tpu_custom_call.1} parent=1 // pred_region
      _
    $region5: #{tpu_custom_call.1} parent=1 // pred_fallthru
      _
    // Predicated region
    $region6: #{tpu_custom_call.1} parent=1 // pred_check
      _
    $region7: #{tpu_custom_call.1} parent=1 // pred_check_branch
      %14 = sbr.rel (0) target = $region9
    $region8: #{tpu_custom_call.1} parent=1 // pred_region
      %s15 = sadd.s32 0, 0
      %s16 = smul.u32 2, %s15
      %18 = vsyncadd [#allocation4], 0
      %s19 = smul.addr %s16, 4
      %s20 = scalar_lea.hbm %s1, %s19
      %s21 = sshll.u32 %s20, 4
      %s22 = int_to_ptr.hbm [resolvable:$true] %s21
      %s23 = sshll.u32 [#allocation3], 4
      %s24 = int_to_ptr.vmem [resolvable:$true] %s23
      %29 = dma.hbm_to_vmem [thread:$0]  %s22, 256, %s24, [#allocation4], 128, 128, 8
    $region9: #{tpu_custom_call.1} parent=1 // pred_fallthru
      _
    // Predicated region
    $region10: #{tpu_custom_call.1} parent=1 // pred_check
      _
    $region11: #{tpu_custom_call.1} parent=1 // pred_check_branch
      %31 = sbr.rel (0) target = $region13
    $region12: #{tpu_custom_call.1} parent=1 // pred_region
      %s32 = sadd.s32 0, 0
      %s33 = smul.u32 2, %s32
      %35 = vsyncadd [#allocation7], 0
      %s36 = smul.addr %s33, 4
      %s37 = scalar_lea.hbm %s2, %s36
      %s38 = sshll.u32 %s37, 4
      %s39 = int_to_ptr.hbm [resolvable:$true] %s38
      %s40 = sshll.u32 [#allocation6], 4
      %s41 = int_to_ptr.vmem [resolvable:$true] %s40
      %46 = dma.hbm_to_vmem [thread:$0]  %s39, 256, %s41, [#allocation7], 128, 128, 8
    $region13: #{tpu_custom_call.1} parent=1 // pred_fallthru
      _
    // Predicated region
    $region14: #{tpu_custom_call.1} parent=1 // pred_check
      _
    $region15: #{tpu_custom_call.1} parent=1 // pred_check_branch
      %48 = sbr.rel (0) target = $region17
    $region16: #{tpu_custom_call.1} parent=1 // pred_region
      %50 = dma.done [#allocation4], 256
    $region17: #{tpu_custom_call.1} parent=1 // pred_fallthru
      _
    // Predicated region
    $region18: #{tpu_custom_call.1} parent=1 // pred_check
      _
    $region19: #{tpu_custom_call.1} parent=1 // pred_check_branch
      %52 = sbr.rel (0) target = $region21
    $region20: #{tpu_custom_call.1} parent=1 // pred_region
      %54 = dma.done [#allocation7], 256
    $region21: #{tpu_custom_call.1} parent=1 // pred_fallthru
      _
    %s55 = sadd.s32 0, 0
    %s56 = smul.u32 2, %s55
    %s57 = sadd.s32 0, 0
    %s58 = smul.u32 2, %s57
    %p59 = scmp.eq.s32.totalorder 0, 0
    // Predicated region
    $region22: #{tpu_custom_call.1} parent=1 // pred_check
      %p60 = pneg %p59
    $region23: #{tpu_custom_call.1} parent=1 // pred_check_branch
      %62 = sbr.rel (%p60) target = $region25
    $region24: #{tpu_custom_call.1} parent=1 // pred_region
      %63 = vst [vmem:[#allocation2] sm:$0xf] 0.0
    $region25: #{tpu_custom_call.1} parent=1 // pred_fallthru
      _
    %v64 = vld [vmem:[#allocation3] sm:$0xff]
    %v65 = vld [vmem:[#allocation3 + $0x8] sm:$0xff]
    %v66 = vld [vmem:[#allocation6] sm:$0xff]
    %v67 = vld [vmem:[#allocation6 + $0x8] sm:$0xff]
    %v68 = vld [vmem:[%s0] sm:$0xf]
    %71 = vst [vmem:[#allocation1] ss:$2 sm:$0xff] %v64
    %v72 = vld.sshfl [vmem:[#allocation1] sm:$0xff pattern:$0x75316420]
    %v73 = vld.sshfl [vmem:[#allocation1 + $0x8] sm:$0xff pattern:$0x75316420]
    %s74 = scalar_lea.vmem [#allocation1], 16
    %75 = vst [vmem:[%s74] ss:$2 sm:$0xff] %v65
    %v76 = vld.sshfl [vmem:[#allocation1 + $0x10] sm:$0xff pattern:$0x75316420]
    %v77 = vld.sshfl [vmem:[#allocation1 + $0x18] sm:$0xff pattern:$0x75316420]
    %vm82 = vcmask 1043456
    %v83 = vsel %vm82, %v72, -inf
    %v84 = vrot.slane %v83, 4
    %v85 = vmax.f32 %v83, %v84
    %v86 = vrot.slane %v85, 2
    %v87 = vmax.f32 %v85, %v86
    %v88 = vrot.slane %v87, 1
    %v89 = vmax.f32 %v87, %v88
    %v90 = vsel %vm82, %v73, -inf
    %v91 = vrot.slane %v90, 4
    %v92 = vmax.f32 %v90, %v91
    %v93 = vrot.slane %v92, 2
    %v94 = vmax.f32 %v92, %v93
    %v95 = vrot.slane %v94, 1
    %v96 = vmax.f32 %v94, %v95
    %v97 = vsel %vm82, %v76, -inf
    %v98 = vrot.slane %v97, 4
    %v99 = vmax.f32 %v97, %v98
    %v100 = vrot.slane %v99, 2
    %v101 = vmax.f32 %v99, %v100
    %v102 = vrot.slane %v101, 1
    %v103 = vmax.f32 %v101, %v102
    %v104 = vsel %vm82, %v77, -inf
    %v105 = vrot.slane %v104, 4
    %v106 = vmax.f32 %v104, %v105
    %v107 = vrot.slane %v106, 2
    %v108 = vmax.f32 %v106, %v107
    %v109 = vrot.slane %v108, 1
    %v110 = vmax.f32 %v108, %v109
    %v115 = vrot.slane %v96, 4
    %v116 = vrot.slane %v110, 4
    %v117 = vsel %vm82, %v89, %v115
    %v118 = vsel %vm82, %v103, %v116
    %v121 = vsub.f32 %v64, %v117
    %v122 = vsub.f32 %v65, %v118
    %v123 = vmul.f32 %v121, 1.442695
    %v124 = vpow.pop %v123
    %v125 = vmul.f32 %v122, 1.442695
    %v126 = vpow.pop %v125
    %129 = vst [vmem:[#allocation1] ss:$2 sm:$0xff] %v124
    %v130 = vld.sshfl [vmem:[#allocation1] sm:$0xff pattern:$0x75316420]
    %v131 = vld.sshfl [vmem:[#allocation1 + $0x8] sm:$0xff pattern:$0x75316420]
    %s132 = scalar_lea.vmem [#allocation1], 16
    %133 = vst [vmem:[%s132] ss:$2 sm:$0xff] %v126
    %v134 = vld.sshfl [vmem:[#allocation1 + $0x10] sm:$0xff pattern:$0x75316420]
    %v135 = vld.sshfl [vmem:[#allocation1 + $0x18] sm:$0xff pattern:$0x75316420]
    %v140 = vsel %vm82, %v130, 0.0
    %v141 = vrot.slane %v140, 4
    %v142 = vadd.f32 %v140, %v141
    %v143 = vrot.slane %v142, 2
    %v144 = vadd.f32 %v142, %v143
    %v145 = vrot.slane %v144, 1
    %v146 = vadd.f32 %v144, %v145
    %v147 = vsel %vm82, %v131, 0.0
    %v148 = vrot.slane %v147, 4
    %v149 = vadd.f32 %v147, %v148
    %v150 = vrot.slane %v149, 2
    %v151 = vadd.f32 %v149, %v150
    %v152 = vrot.slane %v151, 1
    %v153 = vadd.f32 %v151, %v152
    %v154 = vsel %vm82, %v134, 0.0
    %v155 = vrot.slane %v154, 4
    %v156 = vadd.f32 %v154, %v155
    %v157 = vrot.slane %v156, 2
    %v158 = vadd.f32 %v156, %v157
    %v159 = vrot.slane %v158, 1
    %v160 = vadd.f32 %v158, %v159
    %v161 = vsel %vm82, %v135, 0.0
    %v162 = vrot.slane %v161, 4
    %v163 = vadd.f32 %v161, %v162
    %v164 = vrot.slane %v163, 2
    %v165 = vadd.f32 %v163, %v164
    %v166 = vrot.slane %v165, 1
    %v167 = vadd.f32 %v165, %v166
    %v168 = vlog2.pop %v146
    %v169 = vmul.f32 %v168, 0.6931472
    %v170 = vlog2.pop %v153
    %v171 = vmul.f32 %v170, 0.6931472
    %v172 = vlog2.pop %v160
    %v173 = vmul.f32 %v172, 0.6931472
    %v174 = vlog2.pop %v167
    %v175 = vmul.f32 %v174, 0.6931472
    %177 = vset.pattern.permute.xlu0 0
    %178 = vperm.xlu0 %177, %v68
    %v179 = vpop.permute.xlu0 %178
    %v181 = vunpack.c.l.s4 839922192
    %v182 = vunpack.c.0.s8 %v181
    %v183 = vperm.slane %v179, %v182
    %v185 = vmul.f32 %v66, %v183
    %v186 = vmul.f32 %v67, %v183
    %189 = vst [vmem:[#allocation1] ss:$2 sm:$0xff] %v185
    %v190 = vld.sshfl [vmem:[#allocation1] sm:$0xff pattern:$0x75316420]
    %v191 = vld.sshfl [vmem:[#allocation1 + $0x8] sm:$0xff pattern:$0x75316420]
    %s192 = scalar_lea.vmem [#allocation1], 16
    %193 = vst [vmem:[%s192] ss:$2 sm:$0xff] %v186
    %v194 = vld.sshfl [vmem:[#allocation1 + $0x10] sm:$0xff pattern:$0x75316420]
    %v195 = vld.sshfl [vmem:[#allocation1 + $0x18] sm:$0xff pattern:$0x75316420]
    %v200 = vsel %vm82, %v190, 0.0
    %v201 = vrot.slane %v200, 4
    %v202 = vadd.f32 %v200, %v201
    %v203 = vrot.slane %v202, 2
    %v204 = vadd.f32 %v202, %v203
    %v205 = vrot.slane %v204, 1
    %v206 = vadd.f32 %v204, %v205
    %v207 = vsel %vm82, %v191, 0.0
    %v208 = vrot.slane %v207, 4
    %v209 = vadd.f32 %v207, %v208
    %v210 = vrot.slane %v209, 2
    %v211 = vadd.f32 %v209, %v210
    %v212 = vrot.slane %v211, 1
    %v213 = vadd.f32 %v211, %v212
    %v214 = vsel %vm82, %v194, 0.0
    %v215 = vrot.slane %v214, 4
    %v216 = vadd.f32 %v214, %v215
    %v217 = vrot.slane %v216, 2
    %v218 = vadd.f32 %v216, %v217
    %v219 = vrot.slane %v218, 1
    %v220 = vadd.f32 %v218, %v219
    %v221 = vsel %vm82, %v195, 0.0
    %v222 = vrot.slane %v221, 4
    %v223 = vadd.f32 %v221, %v222
    %v224 = vrot.slane %v223, 2
    %v225 = vadd.f32 %v223, %v224
    %v226 = vrot.slane %v225, 1
    %v227 = vadd.f32 %v225, %v226
    %v228 = vmul.f32 %v185, %v121
    %v229 = vmul.f32 %v186, %v122
    %232 = vst [vmem:[#allocation1] ss:$2 sm:$0xff] %v228
    %v233 = vld.sshfl [vmem:[#allocation1] sm:$0xff pattern:$0x75316420]
    %v234 = vld.sshfl [vmem:[#allocation1 + $0x8] sm:$0xff pattern:$0x75316420]
    %s235 = scalar_lea.vmem [#allocation1], 16
    %236 = vst [vmem:[%s235] ss:$2 sm:$0xff] %v229
    %v237 = vld.sshfl [vmem:[#allocation1 + $0x10] sm:$0xff pattern:$0x75316420]
    %v238 = vld.sshfl [vmem:[#allocation1 + $0x18] sm:$0xff pattern:$0x75316420]
    %v243 = vsel %vm82, %v233, 0.0
    %v244 = vrot.slane %v243, 4
    %v245 = vadd.f32 %v243, %v244
    %v246 = vrot.slane %v245, 2
    %v247 = vadd.f32 %v245, %v246
    %v248 = vrot.slane %v247, 1
    %v249 = vadd.f32 %v247, %v248
    %v250 = vsel %vm82, %v234, 0.0
    %v251 = vrot.slane %v250, 4
    %v252 = vadd.f32 %v250, %v251
    %v253 = vrot.slane %v252, 2
    %v254 = vadd.f32 %v252, %v253
    %v255 = vrot.slane %v254, 1
    %v256 = vadd.f32 %v254, %v255
    %v257 = vsel %vm82, %v237, 0.0
    %v258 = vrot.slane %v257, 4
    %v259 = vadd.f32 %v257, %v258
    %v260 = vrot.slane %v259, 2
    %v261 = vadd.f32 %v259, %v260
    %v262 = vrot.slane %v261, 1
    %v263 = vadd.f32 %v261, %v262
    %v264 = vsel %vm82, %v238, 0.0
    %v265 = vrot.slane %v264, 4
    %v266 = vadd.f32 %v264, %v265
    %v267 = vrot.slane %v266, 2
    %v268 = vadd.f32 %v266, %v267
    %v269 = vrot.slane %v268, 1
    %v270 = vadd.f32 %v268, %v269
    %v271 = vmul.f32 %v206, %v169
    %v272 = vmul.f32 %v213, %v171
    %v273 = vmul.f32 %v220, %v173
    %v274 = vmul.f32 %v227, %v175
    %v275 = vsub.f32 %v271, %v249
    %v276 = vsub.f32 %v272, %v256
    %v277 = vsub.f32 %v273, %v263
    %v278 = vsub.f32 %v274, %v270
    %v279 = vld [vmem:[#allocation2] sm:$0xf]
    %v284 = vrot.slane %v276, 6
    %v285 = vrot.slane %v278, 6
    %vm286 = vcmask 1041408
    %v287 = vsel %vm286, %v275, %v284
    %v288 = vsel %vm286, %v277, %v285
    %vm289 = vcmask 1044484
    %v290 = vsel %vm289, %v287, %v287
    %vm291 = vcmask 1046534
    %v292 = vsel %vm291, %v287, %v290
    %v293 = vrot.slane %v288, 7
    %vm294 = vcmask 1041409
    %v295 = vsel %vm294, %v293, %v292
    %vm296 = vcmask 1043459
    %v297 = vsel %vm296, %v293, %v295
    %vm298 = vcmask 1045509
    %v299 = vsel %vm298, %v293, %v297
    %vm300 = vcmask 1047559
    %v301 = vsel %vm300, %v293, %v299
    %v303 = vadd.f32 %v279, %v301
    %304 = vst [vmem:[#allocation2] sm:$0xf] %v303
    // Predicated region
    $region26: #{tpu_custom_call.1} parent=1 // pred_check
      %p305 = pneg %p59
    $region27: #{tpu_custom_call.1} parent=1 // pred_check_branch
      %307 = sbr.rel (%p305) target = $region29
    $region28: #{tpu_custom_call.1} parent=1 // pred_region
      %v308 = vld [vmem:[#allocation2] sm:$0xf]
      %310 = vst [vmem:[#allocation1] ss:$4 sm:$0xff] %v308
      %v311 = vld.sshfl [vmem:[#allocation1] sm:$0xff pattern:$0x73625140]
      %v312 = vld.sshfl [vmem:[#allocation1 + $0x8] sm:$0xff pattern:$0x73625140]
      %v315 = vsel %vm286, %v311, 0.0
      %v316 = vsel %vm286, %v312, 0.0
      %v317 = vadd.f32 %v315, %v316
      %318 = vadd.xlane.f32.xlu0 %v317
      %v319 = vpop.xlane.xlu0 %318
      %v320 = vrot.slane %v319, 4
      %v321 = vadd.f32 %v319, %v320
      %v322 = vrot.slane %v321, 2
      %v323 = vadd.f32 %v321, %v322
      %v324 = vrot.slane %v323, 1
      %v325 = vadd.f32 %v323, %v324
      %s326 = vtos %v325
      %v327 = vstv %s326
      %vm328 = vcmask 0
      %329 = vst.msk [vmem:[#allocation8] sm:$0x1] %vm328, %v327
    $region29: #{tpu_custom_call.1} parent=1 // pred_fallthru
      _
    // Predicated region
    $region30: #{tpu_custom_call.1} parent=1 // pred_check
      _
    $region31: #{tpu_custom_call.1} parent=1 // pred_check_branch
      %331 = sbr.rel (0) target = $region33
    $region32: #{tpu_custom_call.1} parent=1 // pred_region
      %333 = vsyncadd [#allocation5], 0
      %s335 = sshll.u32 [#allocation8], 4
      %s336 = int_to_ptr.vmem [resolvable:$true] %s335
      %s337 = sshll.u32 %s3, 4
      %s338 = int_to_ptr.hbm [resolvable:$true] %s337
      %340 = dma.vmem_to_hbm [thread:$0]  %s336, 16, %s338, [#allocation5]
    $region33: #{tpu_custom_call.1} parent=1 // pred_fallthru
      _
    // Predicated region
    $region34: #{tpu_custom_call.1} parent=1 // pred_check
      _
    $region35: #{tpu_custom_call.1} parent=1 // pred_check_branch
      %342 = sbr.rel (0) target = $region37
    $region36: #{tpu_custom_call.1} parent=1 // pred_region
      %344 = dma.done [#allocation5], 16
    $region37: #{tpu_custom_call.1} parent=1 // pred_fallthru
      _
    %345 = vsyncpa [#allocation4], 1
    %346 = vsyncpa [#allocation7], 1
    %347 = vsyncpa [#allocation5], 1

</llo_original>
